<compile_context>
chip_gen: v7x
topology: tpu7x:2x2x1
jax: 0.10.0
libtpu: 0.0.40
codegen_flags: <defaults>
</compile_context>

<pallas_src>
import math

import jax
import jax.numpy as jnp
from jax.experimental import pallas as pl
from jax.experimental.pallas import tpu as pltpu


def _swish_kernel(beta_ref, x_ref, o_ref):
    x = x_ref[...]                                   # (tm, width)
    beta = beta_ref[...]                             # (1, width) -> broadcast over rows
    # f32 compute path: exact on f32 inputs, safe on v5e (no bf16 VPU/EUP).
    # TODO(synk): optional bf16 fast path on v6e/v7x for bf16 inputs.
    z = beta.astype(jnp.float32) * x.astype(jnp.float32)
    sig = jax.nn.sigmoid(z)                          # exp + recip hit the EUP slot
    o_ref[...] = (x.astype(jnp.float32) * sig).astype(o_ref.dtype)


def _round_up(a, b):
    return ((a + b - 1) // b) * b


def swish(x, betas, *, target_block_bytes=2 * 1024 * 1024):
    """x: any shape whose last dim == betas.shape[0]; betas: (dim,)."""
    dim = betas.shape[0]
    assert x.shape[-1] == dim, "last dim of x must equal dim of betas"
    orig_shape = x.shape

    x2 = x.reshape(-1, dim)                          # (rows, dim)
    rows = x2.shape[0]

    # --- fold rows into lanes so the block's last dim is a multiple of 128 ---
    k = 128 // math.gcd(dim, 128)                    # k*dim % 128 == 0
    width = k * dim
    beta_fold = jnp.tile(betas, k).reshape(1, width)

    # --- pick a row tile that gives ~target_block_bytes per block ------------
    itemsize = jnp.dtype(x.dtype).itemsize
    row_bytes = width * itemsize
    tm_target = max(8, (target_block_bytes // row_bytes) // 8 * 8)
    rows_folded = -(-rows // k)                      # folded rows before padding
    tm = min(tm_target, _round_up(rows_folded, 8))   # don't over-tile tiny inputs

    # --- pad (in original-row units) to a whole number of (k * tm) rows ------
    rows_padded = _round_up(rows, k * tm)
    pad = rows_padded - rows
    if pad:
        x2 = jnp.pad(x2, ((0, pad), (0, 0)))
    xf = x2.reshape(rows_padded // k, width)         # lane-dense slab
    grid_m = xf.shape[0] // tm

    out_f = pl.pallas_call(
        _swish_kernel,
        out_shape=jax.ShapeDtypeStruct(xf.shape, x.dtype),
        grid_spec=pltpu.PrefetchScalarGridSpec(
            num_scalar_prefetch=0,
            grid=(grid_m,),
            in_specs=[
                pl.BlockSpec((1, width), lambda i: (0, 0)),   # beta: resident block
                pl.BlockSpec((tm, width), lambda i: (i, 0)),  # x tile
            ],
            out_specs=pl.BlockSpec((tm, width), lambda i: (i, 0)),
        ),
        compiler_params=pltpu.CompilerParams(
            dimension_semantics=("parallel",),        # shard grid across TCs (v7x megacore)
            vmem_limit_bytes=32 * 1024 * 1024,        # 4 x tile (<~8 MiB) fits comfortably
        ),
    )(beta_fold, xf)

    out = out_f.reshape(rows_padded, dim)[:rows]
    return out.reshape(orig_shape)


if __name__ == "__main__":
    key = jax.random.PRNGKey(0)
    kx, kb = jax.random.split(key)
    dim = 32
    # Small input whose last dim equals `dim`: (batch, channels, seq, dim).
    x = jax.random.normal(kx, (2, 4, 8, dim), dtype=jnp.float32)
    # Module initializes betas = ones; perturb slightly for a stronger broadcast check.
    betas = jnp.ones((dim,), dtype=jnp.float32) + 0.1 * jax.random.normal(kb, (dim,))

    out = swish(x, betas)
    out = jax.block_until_ready(out)

    # Reference check in plain JAX (same math as the PyTorch forward).
    ref = x * jax.nn.sigmoid(betas * x)
    assert out.shape == x.shape
    assert jnp.allclose(out, ref, atol=1e-6, rtol=1e-6)

    print("KERNEL_OK")
</pallas_src>

<mosaic_0001>
module attributes {stable_mosaic.version = 11 : i64} {
  func.func @_swish_kernel(%arg0: i32, %arg1: memref<1x128xf32, #tpu.memory_space<vmem>>, %arg2: memref<16x128xf32, #tpu.memory_space<vmem>>, %arg3: memref<16x128xf32, #tpu.memory_space<vmem>>) attributes {dimension_semantics = [#tpu.dimension_semantics<parallel>], iteration_bounds = array<i64: 1>, scalar_prefetch = 0 : i64, scratch_operands = 0 : i64, tpu.core_type = #tpu.core_type<tc>, window_params = [{pipeline_mode = #tpu.pipeline_mode<synchronous>, transform_indices = @transform_0, window_bounds = array<i64: 1, 128>}, {transform_indices = @transform_1, window_bounds = array<i64: 16, 128>}, {transform_indices = @transform_2, window_bounds = array<i64: 16, 128>}]} {
    %c0 = arith.constant 0 : index
    %c0_0 = arith.constant 0 : index
    %0 = vector.load %arg2[%c0, %c0_0] : memref<16x128xf32, #tpu.memory_space<vmem>>, vector<16x128xf32>
    %c0_1 = arith.constant 0 : index
    %c0_2 = arith.constant 0 : index
    %1 = vector.load %arg1[%c0_1, %c0_2] : memref<1x128xf32, #tpu.memory_space<vmem>>, vector<1x128xf32>
    %2 = vector.broadcast %1 : vector<1x128xf32> to vector<16x128xf32>
    %3 = arith.mulf %2, %0 : vector<16x128xf32>
    %4 = arith.negf %3 : vector<16x128xf32>
    %5 = math.exp %4 : vector<16x128xf32>
    %cst = arith.constant 1.000000e+00 : f32
    %6 = vector.broadcast %cst : f32 to vector<16x128xf32>
    %7 = arith.addf %6, %5 : vector<16x128xf32>
    %8 = arith.divf %6, %7 : vector<16x128xf32>
    %9 = arith.mulf %0, %8 : vector<16x128xf32>
    %c0_3 = arith.constant 0 : index
    %c0_4 = arith.constant 0 : index
    %10 = vector.load %arg3[%c0_3, %c0_4] : memref<16x128xf32, #tpu.memory_space<vmem>>, vector<16x128xf32>
    tpu.vector_store %arg3[%c0_3, %c0_4], %9 {strides = array<i32>} : memref<16x128xf32, #tpu.memory_space<vmem>>, vector<16x128xf32>,
    return
  }
  func.func @transform_0(%arg0: i32) -> (i32, i32) {
    %c0_i32 = arith.constant 0 : i32
    %c0_i32_0 = arith.constant 0 : i32
    %c0_i32_1 = arith.constant 0 : i32
    return %c0_i32, %c0_i32_0 : i32, i32
  }
  func.func @transform_1(%arg0: i32) -> (i32, i32) {
    %c0_i32 = arith.constant 0 : i32
    %c0_i32_0 = arith.constant 0 : i32
    return %arg0, %c0_i32 : i32, i32
  }
  func.func @transform_2(%arg0: i32) -> (i32, i32) {
    %c0_i32 = arith.constant 0 : i32
    %c0_i32_0 = arith.constant 0 : i32
    return %arg0, %c0_i32 : i32, i32
  }
}

</mosaic_0001>

<llo_original>
// kernel: tpu_custom_call.1
$region0: #{tpu_custom_call.1}
  #allocation0 [shape = 'u32[]', space=smem, size = 0x4, offset = 0x4, fixed_abs, tag = 'smem constant byte address 0x4 - core index']
  #allocation1 [shape = 'u32[144,128]{1,0:T(1,128)}', space=vmem, size = 0x12000, scoped, tag = 'internal scratch']
  %s0 = inlined_call_operand.hbm [shape: f32[1,128], index: 0, kind: input, shape index: {}]
  %s1 = inlined_call_operand.hbm [shape: f32[16,128], index: 1, kind: input, shape index: {}]
  %s2 = inlined_call_operand.hbm [shape: f32[16,128], index: 2, kind: output, shape index: {}]
  %s3 = sld [smem:[#allocation0]]
  $region26: #{tpu_custom_call.1} parent=0
    _
  %s5 = ssub.s32 1, %s3
  %s6 = scalar_select 0, %s5, %s3
  $region1: #{tpu_custom_call.1} parent=0
    #allocation2 [shape = 'u8[512]{0}', space=vmem, size = 0x400, scoped, tag = 'input window, operand 0, single buffered']
    #allocation3 [shape = 's32[1]{0}', space=sflag, size = 0x4, scoped, tag = 'scoped memory for tpu_custom_call.1']
    #allocation4 [shape = 's32[1]{0}', space=sflag, size = 0x4, scoped, tag = 'scoped memory for tpu_custom_call.1']
    #allocation5 [shape = 'u8[8192]{0}', space=vmem, size = 0x2000, scoped, tag = 'input window, operand 1, single buffered']
    #allocation6 [shape = 's32[1]{0}', space=sflag, size = 0x4, scoped, tag = 'scoped memory for tpu_custom_call.1']
    #allocation7 [shape = 'u8[8192]{0}', space=vmem, size = 0x2000, scoped, tag = 'output window, operand 0, single buffered']
    %7 = vsyncpa [#allocation3], 0
    %8 = vsyncpa [#allocation6], 0
    %9 = vsyncpa [#allocation4], 0
    // Predicated region
    $region2: #{tpu_custom_call.1} parent=1 // pred_check
      _
    $region3: #{tpu_custom_call.1} parent=1 // pred_check_branch
      %11 = sbr.rel (0) target = $region5
    $region4: #{tpu_custom_call.1} parent=1 // pred_region
      %s13 = ssub.s32 16, 16
      %14 = vsyncadd [#allocation3], %s13
      %s16 = sshll.u32 [#allocation2], 4
      %s17 = int_to_ptr.vmem [resolvable:$true] %s16
      %19 = dma.hbm_to_vmem [thread:$0]  %s0, 16, %s17, [#allocation3]
    $region5: #{tpu_custom_call.1} parent=1 // pred_fallthru
      _
    // Predicated region
    $region6: #{tpu_custom_call.1} parent=1 // pred_check
      _
    $region7: #{tpu_custom_call.1} parent=1 // pred_check_branch
      %21 = sbr.rel (0) target = $region9
    $region8: #{tpu_custom_call.1} parent=1 // pred_region
      %s23 = ssub.s32 256, 256
      %24 = vsyncadd [#allocation6], %s23
      %s25 = sshll.u32 [#allocation5], 4
      %s26 = int_to_ptr.vmem [resolvable:$true] %s25
      %31 = dma.hbm_to_vmem [thread:$0]  %s1, 256, %s26, [#allocation6], 128, 128, 8
    $region9: #{tpu_custom_call.1} parent=1 // pred_fallthru
      _
    // Predicated region
    $region10: #{tpu_custom_call.1} parent=1 // pred_check
      _
    $region11: #{tpu_custom_call.1} parent=1 // pred_check_branch
      %33 = sbr.rel (0) target = $region13
    $region12: #{tpu_custom_call.1} parent=1 // pred_region
      %34 = dma.done [#allocation3], 16
    $region13: #{tpu_custom_call.1} parent=1 // pred_fallthru
      _
    // Predicated region
    $region14: #{tpu_custom_call.1} parent=1 // pred_check
      _
    $region15: #{tpu_custom_call.1} parent=1 // pred_check_branch
      %36 = sbr.rel (0) target = $region17
    $region16: #{tpu_custom_call.1} parent=1 // pred_region
      %37 = dma.done [#allocation6], 256
    $region17: #{tpu_custom_call.1} parent=1 // pred_fallthru
      _
    %v38 = vld [vmem:[#allocation5] sm:$0xff]
    %v39 = vld [vmem:[#allocation5 + $0x8] sm:$0xff]
    %v40 = vld [vmem:[#allocation2] sm:$0x1]
    %v42 = vlaneseq
    %v43 = vshrl.u32 %v42, 7
    %v44 = vsub.s32 0, %v43
    %v45 = vrot.slane %v40, %v44
    %v47 = vmul.f32 %v45, %v38
    %v48 = vmul.f32 %v45, %v39
    %v49 = vxor.u32 %v47, 2147483648
    %v50 = vxor.u32 %v48, 2147483648
    %v51 = vmul.f32 %v49, 1.442695
    %v52 = vpow.pop %v51
    %v53 = vmul.f32 %v50, 1.442695
    %v54 = vpow.pop %v53
    %v55 = vadd.f32 %v52, 1.0
    %v56 = vadd.f32 %v54, 1.0
    %v57 = vrcp.pop %v55
    %v58 = vmul.f32 1.0, %v57
    %v59 = vrcp.pop %v56
    %v60 = vmul.f32 1.0, %v59
    %v61 = vmul.f32 %v38, %v58
    %v62 = vmul.f32 %v39, %v60
    %63 = vst [vmem:[#allocation7] sm:$0xff] %v61
    %64 = vst [vmem:[#allocation7 + $0x8] sm:$0xff] %v62
    // Predicated region
    $region18: #{tpu_custom_call.1} parent=1 // pred_check
      _
    $region19: #{tpu_custom_call.1} parent=1 // pred_check_branch
      %66 = sbr.rel (0) target = $region21
    $region20: #{tpu_custom_call.1} parent=1 // pred_region
      %s68 = ssub.s32 256, 256
      %69 = vsyncadd [#allocation4], %s68
      %s70 = sshll.u32 [#allocation7], 4
      %s71 = int_to_ptr.vmem [resolvable:$true] %s70
      %76 = dma.vmem_to_hbm [thread:$0]  %s71, 256, %s2, [#allocation4], 128, 128, 8
    $region21: #{tpu_custom_call.1} parent=1 // pred_fallthru
      _
    // Predicated region
    $region22: #{tpu_custom_call.1} parent=1 // pred_check
      _
    $region23: #{tpu_custom_call.1} parent=1 // pred_check_branch
      %78 = sbr.rel (0) target = $region25
    $region24: #{tpu_custom_call.1} parent=1 // pred_region
      %79 = dma.done [#allocation4], 256
    $region25: #{tpu_custom_call.1} parent=1 // pred_fallthru
      _
    %80 = vsyncpa [#allocation3], 1
    %81 = vsyncpa [#allocation6], 1
    %82 = vsyncpa [#allocation4], 1

</llo_original>
